<compile_context>
chip_gen: v7x
topology: tpu7x:2x2x1
jax: 0.10.0
libtpu: 0.0.40
codegen_flags: <defaults>
</compile_context>

<pallas_src>
import functools

import jax
import jax.numpy as jnp
import numpy as np
from jax.experimental import pallas as pl
from jax.experimental.pallas import tpu as pltpu


def _cdiv(a, b):
    return -(-a // b)


def _rup(v, m):
    return ((v + m - 1) // m) * m


def _shifted_conv_kernel(x_ref, w_ref, o_ref, *, K, M, Wg):
    """One (batch, H-tile) grid point.

    x_ref : (R, Lc)      R = M + (K-1)*Wg rows of width-folded, lane-dense input
    w_ref : (K, Lc, GC)  block-banded weight slab (one band per kh tap)
    o_ref : (M, GC)      packed output: GC = G*Cout lanes (G pixels per row)
    """
    # K matmuls (one per kh tap); kw taps and the G-pixel group are already
    # folded into the Lc contraction / GC output lanes by the wrapper packing.
    acc = jnp.dot(x_ref[0:M, :], w_ref[0], preferred_element_type=jnp.float32)
    for kh in range(1, K):
        acc = acc + jnp.dot(x_ref[kh * Wg:kh * Wg + M, :], w_ref[kh],
                            preferred_element_type=jnp.float32)
    # Single lane-dense store of the whole tile (no VMEM accumulator RMW).
    o_ref[...] = acc.astype(o_ref.dtype)


def shifted_conv(x_nchw, weight_oihw, kernel_size, padding_mode='zeros',
                 compute_dtype=None):
    """JAX/Pallas equivalent of Conv.forward (NCHW in, NCHW out).

    compute_dtype: optional dtype (e.g. jnp.bfloat16) for the data fed to the
    MXU; accumulation is always f32 and the output keeps the input dtype.
    (Recommended default on v6e/v7x; kept opt-in to preserve f32 numerics.)
    """
    assert padding_mode in [None, 'zeros', 'reflect', 'replicate', 'circular']
    N, Cin, H, W = x_nchw.shape
    Cout = weight_oihw.shape[0]
    K = kernel_size
    offset = K // 2
    pad = K // 2
    mode_map = {None: 'constant', 'zeros': 'constant', 'reflect': 'reflect',
                'replicate': 'edge', 'circular': 'wrap'}
    mode = mode_map[padding_mode]
    if padding_mode is None:
        pad = 0
    out_dtype = x_nchw.dtype
    cdtype = compute_dtype if compute_dtype is not None else x_nchw.dtype

    # --- layout + module padding (matches F.pad([p, p, p+offset, p])) -------
    x = jnp.transpose(x_nchw, (0, 2, 3, 1)).astype(cdtype)              # NHWC
    x = jnp.pad(x, ((0, 0), (pad + offset, pad), (pad, pad), (0, 0)), mode=mode)
    Hp0, Wp0 = x.shape[1], x.shape[2]
    H_out_true = Hp0 - (K - 1) - offset   # PyTorch crops the last `offset` rows
    W_out_true = Wp0 - (K - 1)

    # --- packing geometry ----------------------------------------------------
    G = max(1, 128 // Cout)               # output pixels packed per 128-lane row
    GC = G * Cout                         # packed output lane width
    W_out = _rup(W_out_true, G)           # pad W so groups tile evenly
    Wg = W_out // G                       # groups per row
    Lc = (G + K - 1) * Cin                # folded lane / contraction width

    # --- H-tile size: bound per-tile VMEM, keep >= 2 programs for v7x -------
    cbytes = jnp.dtype(cdtype).itemsize
    obytes = jnp.dtype(out_dtype).itemsize
    per_row = Wg * (Lc * cbytes + GC * (4 + obytes))          # x + acc + out
    TH = max(1, min(H_out_true, max(8, (4 << 20) // max(per_row, 1))))
    if N * _cdiv(H_out_true, TH) < 2 and H_out_true >= 2:
        TH = _cdiv(H_out_true, 2)
    n_th = _cdiv(H_out_true, TH)
    H_out_pad = n_th * TH

    # --- alignment zero-padding (cropped after the call) --------------------
    need_Wp = W_out + K - 1
    need_Hp = H_out_pad + K - 1
    x = jnp.pad(x, ((0, 0),
                    (0, max(0, need_Hp - Hp0)),
                    (0, max(0, need_Wp - Wp0)),
                    (0, 0)))
    Hp, Wp = x.shape[1], x.shape[2]

    # --- fold W groups (with (K-1)-col overlap) and Cin into the lane dim ---
    widx = jnp.arange(Wg)[:, None] * G + jnp.arange(G + K - 1)[None, :]
    xf = x[:, :, widx, :].reshape(N, Hp, Wg, Lc)              # (N, Hp, Wg, Lc)
    # --- H-tile windows with a (K-1)-row halo --------------------------------
    hidx = jnp.arange(n_th)[:, None] * TH + jnp.arange(TH + K - 1)[None, :]
    R = (TH + K - 1) * Wg
    xt = xf[:, hidx].reshape(N, n_th, R, Lc)                  # (N, n_th, R, Lc)

    # --- block-banded weight slab: (K, Lc, GC) --------------------------------
    Wt = jnp.transpose(weight_oihw, (2, 3, 1, 0)).astype(cdtype)  # (K, K, Cin, Cout)
    cols = [jnp.pad(Wt, ((0, 0), (f, G - 1 - f), (0, 0), (0, 0)))  # (K, G+K-1, Cin, Cout)
            for f in range(G)]
    slab = jnp.stack(cols, axis=3).reshape(K, Lc, GC)

    M = TH * Wg
    kern = functools.partial(_shifted_conv_kernel, K=K, M=M, Wg=Wg)

    flops = 2 * N * n_th * K * M * Lc * GC
    bytes_accessed = (int(xt.size) * cbytes + int(slab.size) * cbytes
                      + N * n_th * M * GC * obytes)

    # Explicit VMEM budget for the tile (double-buffered in/out + acc temp).
    xblk = _rup(R, 8) * _rup(Lc, 128) * cbytes
    wblk = K * _rup(Lc, 8) * _rup(GC, 128) * cbytes
    oblk = _rup(M, 8) * _rup(GC, 128) * obytes
    accblk = _rup(M, 8) * _rup(GC, 128) * 4
    est = 2 * xblk + 2 * wblk + 2 * oblk + accblk + (2 << 20)
    vmem_limit = int(min(48 << 20, max(16 << 20, 2 * est)))

    out = pl.pallas_call(
        kern,
        out_shape=jax.ShapeDtypeStruct((N, n_th, M, GC), out_dtype),
        grid_spec=pltpu.PrefetchScalarGridSpec(
            num_scalar_prefetch=0,
            grid=(N, n_th),
            in_specs=[
                pl.BlockSpec((None, None, R, Lc), lambda n, t: (n, t, 0, 0)),
                pl.BlockSpec((K, Lc, GC), lambda n, t: (0, 0, 0)),
            ],
            out_specs=pl.BlockSpec((None, None, M, GC),
                                   lambda n, t: (n, t, 0, 0)),
        ),
        compiler_params=pltpu.CompilerParams(
            # Batch elements and H-tiles are fully independent -> shard across
            # both TensorCores on v7x even for N=1; neutral on v5e/v6e.
            dimension_semantics=("parallel", "parallel"),
            vmem_limit_bytes=vmem_limit),
        cost_estimate=pl.CostEstimate(flops=flops, transcendentals=0,
                                      bytes_accessed=bytes_accessed),
    )(xt, slab)

    # --- unpack the (G pixels x Cout)-per-row output, crop, restore NCHW ----
    out = out.reshape(N, n_th, TH, Wg, G, Cout).reshape(N, H_out_pad, W_out, Cout)
    out = out[:, :H_out_true, :W_out_true, :]
    return jnp.transpose(out, (0, 3, 1, 2))                          # NCHW


def _reference(x_nchw, weight_oihw, K, padding_mode='zeros'):
    """Pure-JAX reference reproducing the PyTorch forward."""
    offset = K // 2
    pad = K // 2
    mode_map = {None: 'constant', 'zeros': 'constant', 'reflect': 'reflect',
                'replicate': 'edge', 'circular': 'wrap'}
    mode = mode_map[padding_mode]
    if padding_mode is None:
        pad = 0
    xp = jnp.pad(x_nchw, ((0, 0), (0, 0), (pad + offset, pad), (pad, pad)),
                 mode=mode)
    y = jax.lax.conv_general_dilated(
        xp, weight_oihw, window_strides=(1, 1), padding='VALID',
        dimension_numbers=('NCHW', 'OIHW', 'NCHW'),
        preferred_element_type=jnp.float32)
    if offset > 0:
        y = y[:, :, :-offset, :]
    return y


if __name__ == "__main__":
    key = jax.random.PRNGKey(0)
    N, Cin, H, W = 2, 4, 16, 16
    Cout, K = 8, 3

    kx, kw = jax.random.split(key)
    x = jax.random.normal(kx, (N, Cin, H, W), dtype=jnp.float32)

    # Deterministic kaiming_uniform_ init (a=0 -> gain=sqrt(2), fan_in=Cin*K*K),
    # same shape as nn.Conv2d weight (O, I, K, K).
    fan_in = Cin * K * K
    bound = float(np.sqrt(2.0) * np.sqrt(3.0 / fan_in))
    weight = jax.random.uniform(kw, (Cout, Cin, K, K), jnp.float32,
                                minval=-bound, maxval=bound)

    # f32 path, 'zeros' padding (default module config).
    out = jax.block_until_ready(shifted_conv(x, weight, K, padding_mode='zeros'))
    ref = _reference(x, weight, K, padding_mode='zeros')
    assert out.shape == (N, Cout, H, W), out.shape
    np.testing.assert_allclose(np.asarray(out), np.asarray(ref),
                               rtol=1e-4, atol=1e-4)

    # padding_mode=None path (no H/W padding, last `offset` rows still cropped).
    out_none = jax.block_until_ready(shifted_conv(x, weight, K, padding_mode=None))
    ref_none = _reference(x, weight, K, padding_mode=None)
    assert out_none.shape == (N, Cout, H - K + 1, W - K + 1), out_none.shape
    np.testing.assert_allclose(np.asarray(out_none), np.asarray(ref_none),
                               rtol=1e-4, atol=1e-4)

    # bf16 compute path (halved HBM input traffic on v6e/v7x), f32 accumulation.
    out_bf = jax.block_until_ready(
        shifted_conv(x, weight, K, padding_mode='zeros',
                     compute_dtype=jnp.bfloat16))
    ref_bf = _reference(x.astype(jnp.bfloat16), weight.astype(jnp.bfloat16),
                        K, padding_mode='zeros')
    np.testing.assert_allclose(np.asarray(out_bf), np.asarray(ref_bf),
                               rtol=1e-2, atol=1e-2)

    print("KERNEL_OK")
</pallas_src>

<mosaic_0001>
module attributes {stable_mosaic.version = 11 : i64} {
  func.func @_shifted_conv_kernel(%arg0: i32, %arg1: i32, %arg2: memref<1x1x18x72xf32, #tpu.memory_space<vmem>>, %arg3: memref<3x72x128xf32, #tpu.memory_space<vmem>>, %arg4: memref<1x1x16x128xf32, #tpu.memory_space<vmem>>) attributes {dimension_semantics = [#tpu.dimension_semantics<parallel>, #tpu.dimension_semantics<parallel>], iteration_bounds = array<i64: 2, 1>, scalar_prefetch = 0 : i64, scratch_operands = 0 : i64, tpu.core_type = #tpu.core_type<tc>, window_params = [{transform_indices = @transform_0, window_bounds = array<i64: 1, 1, 18, 72>}, {pipeline_mode = #tpu.pipeline_mode<synchronous>, transform_indices = @transform_1, window_bounds = array<i64: 3, 72, 128>}, {transform_indices = @transform_2, window_bounds = array<i64: 1, 1, 16, 128>}]} {
    %c0 = arith.constant 0 : index
    %c0_0 = arith.constant 0 : index
    %c0_1 = arith.constant 0 : index
    %c0_2 = arith.constant 0 : index
    %0 = vector.load %arg2[%c0, %c0_0, %c0_1, %c0_2] : memref<1x1x18x72xf32, #tpu.memory_space<vmem>>, vector<1x1x16x72xf32>
    %1 = vector.shape_cast %0 : vector<1x1x16x72xf32> to vector<16x72xf32>
    %c0_3 = arith.constant 0 : index
    %c0_4 = arith.constant 0 : index
    %c0_5 = arith.constant 0 : index
    %2 = vector.load %arg3[%c0_3, %c0_4, %c0_5] : memref<3x72x128xf32, #tpu.memory_space<vmem>>, vector<1x72x128xf32>
    %3 = vector.shape_cast %2 : vector<1x72x128xf32> to vector<72x128xf32>
    %cst = arith.constant dense<0.000000e+00> : vector<16x128xf32>
    %4 = tpu.matmul %1, %3, %cst {dimension_numbers = #tpu.dot_dimension_numbers<[1], [0], [0], [1], [0, 0, 1, 1], [], []>} : vector<16x72xf32>, vector<72x128xf32>, vector<16x128xf32> -> vector<16x128xf32>
    %c0_6 = arith.constant 0 : index
    %c0_7 = arith.constant 0 : index
    %c1 = arith.constant 1 : index
    %c0_8 = arith.constant 0 : index
    %5 = vector.load %arg2[%c0_6, %c0_7, %c1, %c0_8] : memref<1x1x18x72xf32, #tpu.memory_space<vmem>>, vector<1x1x16x72xf32>
    %6 = vector.shape_cast %5 : vector<1x1x16x72xf32> to vector<16x72xf32>
    %c1_9 = arith.constant 1 : index
    %c0_10 = arith.constant 0 : index
    %c0_11 = arith.constant 0 : index
    %7 = vector.load %arg3[%c1_9, %c0_10, %c0_11] : memref<3x72x128xf32, #tpu.memory_space<vmem>>, vector<1x72x128xf32>
    %8 = vector.shape_cast %7 : vector<1x72x128xf32> to vector<72x128xf32>
    %cst_12 = arith.constant dense<0.000000e+00> : vector<16x128xf32>
    %9 = tpu.matmul %6, %8, %cst_12 {dimension_numbers = #tpu.dot_dimension_numbers<[1], [0], [0], [1], [0, 0, 1, 1], [], []>} : vector<16x72xf32>, vector<72x128xf32>, vector<16x128xf32> -> vector<16x128xf32>
    %10 = arith.addf %4, %9 : vector<16x128xf32>
    %c0_13 = arith.constant 0 : index
    %c0_14 = arith.constant 0 : index
    %c2 = arith.constant 2 : index
    %c0_15 = arith.constant 0 : index
    %11 = vector.load %arg2[%c0_13, %c0_14, %c2, %c0_15] : memref<1x1x18x72xf32, #tpu.memory_space<vmem>>, vector<1x1x16x72xf32>
    %12 = vector.shape_cast %11 : vector<1x1x16x72xf32> to vector<16x72xf32>
    %c2_16 = arith.constant 2 : index
    %c0_17 = arith.constant 0 : index
    %c0_18 = arith.constant 0 : index
    %13 = vector.load %arg3[%c2_16, %c0_17, %c0_18] : memref<3x72x128xf32, #tpu.memory_space<vmem>>, vector<1x72x128xf32>
    %14 = vector.shape_cast %13 : vector<1x72x128xf32> to vector<72x128xf32>
    %cst_19 = arith.constant dense<0.000000e+00> : vector<16x128xf32>
    %15 = tpu.matmul %12, %14, %cst_19 {dimension_numbers = #tpu.dot_dimension_numbers<[1], [0], [0], [1], [0, 0, 1, 1], [], []>} : vector<16x72xf32>, vector<72x128xf32>, vector<16x128xf32> -> vector<16x128xf32>
    %16 = arith.addf %10, %15 : vector<16x128xf32>
    %c0_20 = arith.constant 0 : index
    %c0_21 = arith.constant 0 : index
    %c0_22 = arith.constant 0 : index
    %c0_23 = arith.constant 0 : index
    %17 = vector.load %arg4[%c0_20, %c0_21, %c0_22, %c0_23] : memref<1x1x16x128xf32, #tpu.memory_space<vmem>>, vector<1x1x16x128xf32>
    %18 = vector.shape_cast %17 : vector<1x1x16x128xf32> to vector<16x128xf32>
    %19 = vector.shape_cast %16 : vector<16x128xf32> to vector<1x1x16x128xf32>
    tpu.vector_store %arg4[%c0_20, %c0_21, %c0_22, %c0_23], %19 {strides = array<i32>} : memref<1x1x16x128xf32, #tpu.memory_space<vmem>>, vector<1x1x16x128xf32>,
    return
  }
  func.func @transform_0(%arg0: i32, %arg1: i32) -> (i32, i32, i32, i32) {
    %c0_i32 = arith.constant 0 : i32
    %c0_i32_0 = arith.constant 0 : i32
    %c0_i32_1 = arith.constant 0 : i32
    return %arg0, %arg1, %c0_i32, %c0_i32_0 : i32, i32, i32, i32
  }
  func.func @transform_1(%arg0: i32, %arg1: i32) -> (i32, i32, i32) {
    %c0_i32 = arith.constant 0 : i32
    %c0_i32_0 = arith.constant 0 : i32
    %c0_i32_1 = arith.constant 0 : i32
    %c0_i32_2 = arith.constant 0 : i32
    return %c0_i32, %c0_i32_0, %c0_i32_1 : i32, i32, i32
  }
  func.func @transform_2(%arg0: i32, %arg1: i32) -> (i32, i32, i32, i32) {
    %c0_i32 = arith.constant 0 : i32
    %c0_i32_0 = arith.constant 0 : i32
    %c0_i32_1 = arith.constant 0 : i32
    return %arg0, %arg1, %c0_i32, %c0_i32_0 : i32, i32, i32, i32
  }
}

</mosaic_0001>

<llo_original>
// kernel: tpu_custom_call.1
$region0: #{tpu_custom_call.1}
  #allocation0 [shape = 'u32[]', space=smem, size = 0x4, offset = 0x4, fixed_abs, tag = 'smem constant byte address 0x4 - core index']
  #allocation1 [shape = 'u32[144,128]{1,0:T(1,128)}', space=vmem, size = 0x12000, scoped, tag = 'internal scratch']
  %s0 = inlined_call_operand.vmem [shape: f32[2,1,18,72], index: 0, kind: input, shape index: {}]
  %s1 = inlined_call_operand.hbm [shape: f32[3,72,128], index: 1, kind: input, shape index: {}]
  %s2 = inlined_call_operand.hbm [shape: f32[2,1,16,128], index: 2, kind: output, shape index: {}]
  %s3 = sld [smem:[#allocation0]]
  $region45: #{tpu_custom_call.1} parent=0
    _
  %s5 = ssub.s32 1, %s3
  %s6 = scalar_select 0, %s5, %s3
  $region1: #{tpu_custom_call.1} parent=0
    #allocation2 [shape = 'u8[110592]{0}', space=vmem, size = 0x1b000, scoped, tag = 'input window, operand 1, single buffered']
    #allocation3 [shape = 's32[2]{0}', space=sflag, size = 0x8, scoped, tag = 'scoped memory for tpu_custom_call.1']
    #allocation4 [shape = 's32[2]{0}', space=sflag, size = 0x8, scoped, tag = 'scoped memory for tpu_custom_call.1']
    #allocation5 [shape = 'u8[16384]{0}', space=vmem, size = 0x4000, scoped, tag = 'output window, operand 0']
    %7 = vsyncpa [#allocation3], 0
    %8 = vsyncpa [#allocation4], 0
    %s9 = scalar_lea.sflag [#allocation4], 1
    %10 = vsyncpa %s9, 0
    loop: start=0, step=1, limit=4
    $region2: #{tpu_custom_call.1} parent=1 // loop_pre_header
      _
    $region3: #{tpu_custom_call.1} parent=1 // loop_header
      %s12 = sphi 0, %s16
      %p13 = scmp.ge.s32.totalorder %s12, 4
      %s19 = sphi 0, %s31
      %s20 = sphi 0, %s27
      %s21 = sphi 0, %s19
      %s22 = sphi 0, %s20
      %s23 = sphi 0, %s21
      %s24 = sphi 0, %s22
      %s36 = sphi 0, %s38
      %s39 = sphi 0, %s36
      %s40 = sphi 0, %s39
      %s56 = sphi 0, %s40
      %s60 = sphi 0, %s60
      %s62 = sphi 0, %s60
      %s63 = sphi 0, %s62
      %s77 = sphi 0, %s63
      %s85 = sphi 0, %s87
      %s88 = sphi 0, %s85
      %s89 = sphi 0, %s88
      %s105 = sphi 0, %s89
    $region4: #{tpu_custom_call.1} parent=1 // loop_header_branch
      %15 = sbr.rel (%p13) target = $region8
    $region5: #{tpu_custom_call.1} parent=1 // loop_body
      %s17 = ssub.s32 %s12, 1
      %s18 = ssub.s32 %s12, 2
      %s25 = sadd.s32 1, %s20
      %p26 = scmp.ge.s32.totalorder %s25, 1
      %s27 = scalar_select %p26, 0, %s25
      %s28 = sadd.s32 1, %s19
      %s29 = scalar_select %p26, %s28, %s19
      %p30 = scmp.ge.s32.totalorder %s29, 2
      %s31 = scalar_select %p30, 0, %s29
      %s32 = ssub.s32 %s19, %s31
      %s33 = ssub.s32 %s20, %s27
      %s34 = sor.u32 %s32, %s33
      %p35 = scmp.eq.s32.totalorder %s34, 0
      %s37 = sadd.s32 %s36, 1
      %s38 = scalar_select %p35, %s36, %s37
      %p41 = pneg %p35
      %p42 = scmp.eq.s32.totalorder %s12, 1
      %p43 = por %p41, %p42
      %p44 = scmp.ne.s32.totalorder %s36, %s39
      %p45 = scmp.eq.s32.totalorder %s12, 0
      %p46 = por %p44, %p45
      %p47 = scmp.ne.s32.totalorder %s36, %s39
      %p48 = scmp.eq.s32.totalorder %s17, 1
      %p49 = por %p47, %p48
      %p50 = scmp.ne.s32.totalorder %s39, %s40
      %p51 = scmp.eq.s32.totalorder %s17, 0
      %p52 = por %p50, %p51
      %p53 = scmp.ne.s32.totalorder %s39, %s40
      %p54 = scmp.eq.s32.totalorder %s18, 1
      %p55 = por %p53, %p54
      %p57 = scmp.ne.s32.totalorder %s40, %s56
      %p58 = scmp.eq.s32.totalorder %s18, 0
      %p59 = por %p57, %p58
      %s61 = sadd.s32 %s60, 1
      %p64 = scmp.eq.s32.totalorder %s12, 1
      %p65 = scmp.ne.s32.totalorder %s60, %s62
      %p66 = scmp.eq.s32.totalorder %s12, 0
      %p67 = por %p65, %p66
      %p68 = scmp.ne.s32.totalorder %s60, %s62
      %p69 = scmp.eq.s32.totalorder %s17, 1
      %p70 = por %p68, %p69
      %p71 = scmp.ne.s32.totalorder %s62, %s63
      %p72 = scmp.eq.s32.totalorder %s17, 0
      %p73 = por %p71, %p72
      %p74 = scmp.ne.s32.totalorder %s62, %s63
      %p75 = scmp.eq.s32.totalorder %s18, 1
      %p76 = por %p74, %p75
      %p78 = scmp.ne.s32.totalorder %s63, %s77
      %p79 = scmp.eq.s32.totalorder %s18, 0
      %p80 = por %p78, %p79
      %s81 = ssub.s32 %s19, %s31
      %s82 = ssub.s32 %s20, %s27
      %s83 = sor.u32 %s81, %s82
      %p84 = scmp.eq.s32.totalorder %s83, 0
      %s86 = sadd.s32 %s85, 1
      %s87 = scalar_select %p84, %s85, %s86
      %p90 = pneg %p84
      %p91 = scmp.eq.s32.totalorder %s12, 1
      %p92 = por %p90, %p91
      %p93 = scmp.ne.s32.totalorder %s85, %s88
      %p94 = scmp.eq.s32.totalorder %s12, 0
      %p95 = por %p93, %p94
      %p96 = scmp.ne.s32.totalorder %s85, %s88
      %p97 = scmp.eq.s32.totalorder %s17, 1
      %p98 = por %p96, %p97
      %p99 = scmp.ne.s32.totalorder %s88, %s89
      %p100 = scmp.eq.s32.totalorder %s17, 0
      %p101 = por %p99, %p100
      %p102 = scmp.ne.s32.totalorder %s88, %s89
      %p103 = scmp.eq.s32.totalorder %s18, 1
      %p104 = por %p102, %p103
      %p106 = scmp.ne.s32.totalorder %s89, %s105
      %p107 = scmp.eq.s32.totalorder %s18, 0
      %p108 = por %p106, %p107
      %p109 = scmp.le.s32.totalorder 1, %s12
      %p110 = scmp.lt.s32.totalorder %s12, 3
      %p111 = pnand %p109, %p110
      %p112 = pneg %p111
      // Predicated region
      $region9: #{tpu_custom_call.1} parent=5 // pred_check
        _
      $region10: #{tpu_custom_call.1} parent=5 // pred_check_branch
        %114 = sbr.rel (%p111) target = $region12
      $region11: #{tpu_custom_call.1} parent=5 // pred_region
        %s115 = ssub.s32 %s12, 1
        // Predicated region
        $region13: #{tpu_custom_call.1} parent=11 // pred_check
          %p116 = pneg %p73
        $region14: #{tpu_custom_call.1} parent=11 // pred_check_branch
          %118 = sbr.rel (%p116) target = $region16
        $region15: #{tpu_custom_call.1} parent=11 // pred_region
          %s120 = ssub.s32 3456, 3456
          %121 = vsyncadd [#allocation3], %s120
          %s122 = sshll.u32 [#allocation2], 4
          %s123 = int_to_ptr.vmem [resolvable:$true] %s122
          %128 = dma.hbm_to_vmem [thread:$0]  %s1, 3456, %s123, [#allocation3], 128, 128, 8
        $region16: #{tpu_custom_call.1} parent=11 // pred_fallthru
          _
      $region12: #{tpu_custom_call.1} parent=5 // pred_fallthru
        _
      %p129 = scmp.lt.s32.totalorder %s12, 2
      // Predicated region
      $region17: #{tpu_custom_call.1} parent=5 // pred_check
        %p130 = pneg %p129
      $region18: #{tpu_custom_call.1} parent=5 // pred_check_branch
        %132 = sbr.rel (%p130) target = $region20
      $region19: #{tpu_custom_call.1} parent=5 // pred_region
        // Predicated region
        $region21: #{tpu_custom_call.1} parent=19 // pred_check
          %p133 = pneg %p46
        $region22: #{tpu_custom_call.1} parent=19 // pred_check_branch
          %135 = sbr.rel (%p133) target = $region24
        $region23: #{tpu_custom_call.1} parent=19 // pred_region
          %p136 = scmp.lt.s32.totalorder %s19, 1
          %s137 = scalar_select %p136, %s19, 1
          %p138 = scmp.lt.s32.totalorder %s20, 0
          %s139 = scalar_select %p138, %s20, 0
          %s140 = smul.addr %s139, 3
          %s141 = smul.addr %s137, 3
          %s142 = sadd.s32 %s140, %s141
          %s143 = smul.addr %s142, 8
          %s144 = scalar_lea.vmem %s0, %s143
        $region24: #{tpu_custom_call.1} parent=19 // pred_fallthru
          _
      $region20: #{tpu_custom_call.1} parent=5 // pred_fallthru
        _
      %p145 = scmp.le.s32.totalorder 1, %s12
      %p146 = scmp.lt.s32.totalorder %s12, 3
      %p147 = pnand %p145, %p146
      %p148 = pneg %p147
      // Predicated region
      $region25: #{tpu_custom_call.1} parent=5 // pred_check
        _
      $region26: #{tpu_custom_call.1} parent=5 // pred_check_branch
        %150 = sbr.rel (%p147) target = $region28
      $region27: #{tpu_custom_call.1} parent=5 // pred_region
        %s151 = ssub.s32 %s12, 1
        // Predicated region
        $region29: #{tpu_custom_call.1} parent=27 // pred_check
          %p152 = pneg %p73
        $region30: #{tpu_custom_call.1} parent=27 // pred_check_branch
          %154 = sbr.rel (%p152) target = $region32
        $region31: #{tpu_custom_call.1} parent=27 // pred_region
          %155 = dma.done [#allocation3], 3456
        $region32: #{tpu_custom_call.1} parent=27 // pred_fallthru
          _
        %p156 = scmp.lt.s32.totalorder %s21, 1
        %s157 = scalar_select %p156, %s21, 1
        %p158 = scmp.lt.s32.totalorder %s22, 0
        %s159 = scalar_select %p158, %s22, 0
        %s160 = smul.addr %s159, 3
        %s161 = smul.addr %s157, 3
        %s162 = sadd.s32 %s160, %s161
        %s163 = smul.addr %s162, 8
        %s164 = scalar_lea.vmem %s0, %s163
        %p165 = pneg %p52
        %p166 = pneg %p49
        %p167 = pneg %p73
        %p168 = pneg %p70
        %p169 = pneg %p101
        %p170 = pneg %p98
        %s171 = sand.u32 %s88, 1
        %s172 = scalar_lea.sflag [#allocation4], %s171
        %s173 = sand.u32 %s88, 1
        %s174 = smul.addr %s173, 16
        %s175 = scalar_lea.vmem [#allocation5], %s174
        %p176 = scmp.lt.s32.totalorder %s21, 1
        %s177 = scalar_select %p176, %s21, 1
        %p178 = scmp.lt.s32.totalorder %s22, 0
        %s179 = scalar_select %p178, %s22, 0
        %s180 = smul.addr %s179, 3
        %s181 = smul.addr %s177, 3
        %s182 = sadd.s32 %s180, %s181
        %s183 = smul.addr %s182, 8
        %s184 = scalar_lea.vmem %s0, %s183
        %v185 = vld [vmem:[%s184] sm:$0xff]
        %v186 = vld [vmem:[%s184 + $0x8] sm:$0xff]
        %v187 = vld [vmem:[#allocation2] sm:$0xff]
        %v188 = vld [vmem:[#allocation2 + $0x8] sm:$0xff]
        %v189 = vld [vmem:[#allocation2 + $0x10] sm:$0xff]
        %v190 = vld [vmem:[#allocation2 + $0x18] sm:$0xff]
        %v191 = vld [vmem:[#allocation2 + $0x20] sm:$0xff]
        %v192 = vld [vmem:[#allocation2 + $0x28] sm:$0xff]
        %v193 = vld [vmem:[#allocation2 + $0x30] sm:$0xff]
        %v194 = vld [vmem:[#allocation2 + $0x38] sm:$0xff]
        %v195 = vld [vmem:[#allocation2 + $0x40] sm:$0xff]
        %v196 = vld [vmem:[%s184 + $0x1] sm:$0xff]
        %v197 = vld [vmem:[%s184 + $0x9] sm:$0xff]
        %s198 = scalar_lea.vmem [#allocation2], 72
        %v199 = vld [vmem:[%s198] sm:$0xff]
        %v200 = vld [vmem:[%s198 + $0x8] sm:$0xff]
        %v201 = vld [vmem:[%s198 + $0x10] sm:$0xff]
        %v202 = vld [vmem:[%s198 + $0x18] sm:$0xff]
        %v203 = vld [vmem:[%s198 + $0x20] sm:$0xff]
        %v204 = vld [vmem:[%s198 + $0x28] sm:$0xff]
        %v205 = vld [vmem:[%s198 + $0x30] sm:$0xff]
        %v206 = vld [vmem:[%s198 + $0x38] sm:$0xff]
        %v207 = vld [vmem:[%s198 + $0x40] sm:$0xff]
        %vm208 = vcmask 588800
        %v210 = vsel %vm208, %v196, 0
        %v213 = vsel %vm208, %v197, 0
        %215 = vmatprep.subr.mxu0 0.0
        %216 = vmatpush1.msra.mxu0 %v199
        %217 = vmatprep.subr.mxu0 0.0
        %218 = vmatpush1.msra.mxu0 %v200
        %219 = vmatprep.subr.mxu0 0.0
        %220 = vmatpush1.msra.mxu0 %v201
        %221 = vmatprep.subr.mxu0 0.0
        %222 = vmatpush1.msra.mxu0 %v202
        %223 = vmatprep.subr.mxu0 0.0
        %224 = vmatpush1.msra.mxu0 %v203
        %225 = vmatprep.subr.mxu0 0.0
        %226 = vmatpush1.msra.mxu0 %v204
        %227 = vmatprep.subr.mxu0 0.0
        %228 = vmatpush1.msra.mxu0 %v205
        %229 = vmatprep.subr.mxu0 0.0
        %230 = vmatpush1.msra.mxu0 %v206
        %231 = vmatprep.subr.mxu0 0.0
        %232 = vmatpush1.msra.mxu0 %v207
        %233 = vmatprep.subr.mxu0 0.0
        %234 = vmatpush1.msra.mxu0 0.0
        %235 = vmatprep.subr.mxu0 0.0
        %236 = vmatpush1.msra.mxu0 0.0
        %237 = vmatprep.subr.mxu0 0.0
        %238 = vmatpush1.msra.mxu0 0.0
        %239 = vmatprep.subr.mxu0 0.0
        %240 = vmatpush1.msra.mxu0 0.0
        %241 = vmatprep.subr.mxu0 0.0
        %242 = vmatpush1.msra.mxu0 0.0
        %243 = vmatprep.subr.mxu0 0.0
        %244 = vmatpush1.msra.mxu0 0.0
        %245 = vmatprep.subr.mxu0 0.0
        %246 = vmatpush1.msra.mxu0 0.0
        %247 = vmatprep.subr.mxu0 0.0
        %248 = vmatpush1.msra.mxu0 0.0
        %249 = vmatprep.subr.mxu0 0.0
        %250 = vmatpush1.msra.mxu0 0.0
        %251 = vmatprep.subr.mxu0 0.0
        %252 = vmatpush1.msra.mxu0 0.0
        %253 = vmatprep.subr.mxu0 0.0
        %254 = vmatpush1.msra.mxu0 0.0
        %255 = vmatprep.subr.mxu0 0.0
        %256 = vmatpush1.msra.mxu0 0.0
        %257 = vmatprep.subr.mxu0 0.0
        %258 = vmatpush1.msra.mxu0 0.0
        %259 = vmatprep.subr.mxu0 0.0
        %260 = vmatpush1.msra.mxu0 0.0
        %261 = vmatprep.subr.mxu0 0.0
        %262 = vmatpush1.msra.mxu0 0.0
        %263 = vmatprep.subr.mxu0 0.0
        %264 = vmatpush1.msra.mxu0 0.0
        %265 = vmatprep.subr.mxu0 0.0
        %266 = vmatpush1.msra.mxu0 0.0
        %267 = vmatprep.subr.mxu0 0.0
        %268 = vmatpush1.msra.mxu0 0.0
        %269 = vmatprep.subr.mxu0 0.0
        %270 = vmatpush1.msra.mxu0 0.0
        %271 = vmatprep.subr.mxu0 0.0
        %272 = vmatpush1.msra.mxu0 0.0
        %273 = vmatprep.subr.mxu0 0.0
        %274 = vmatpush1.msra.mxu0 0.0
        %275 = vmatprep.subr.mxu0 0.0
        %276 = vmatpush1.msra.mxu0 0.0
        %277 = vmatprep.subr.mxu0 0.0
        %278 = vmatpush1.msra.mxu0 0.0
        %279 = vmatprep.mubr.f32.mxu0 0.0
        %280 = vmatmul.mubr.f32.gmra.mrb[0].mxu0 %v210
        %v281 = vpop.f32.mrb[0].mxu0
        %v282 = vadd.f32 0.0, %v281
        %v283 = vpop.f32.mrb[0].mxu0
        %284 = vmatprep.mubr.f32.mxu0 0.0
        %285 = vmatmul.mubr.f32.gmra.mrb[0].mxu0 %v213
        %v286 = vpop.f32.mrb[0].mxu0
        %v287 = vadd.f32 0.0, %v286
        %v288 = vpop.f32.mrb[0].mxu0
        %289 = vdwg.mxu0
        %v291 = vsel %vm208, %v185, 0
        %v294 = vsel %vm208, %v186, 0
        %296 = vmatprep.subr.mxu0 0.0
        %297 = vmatpush1.msra.mxu0 %v187
        %298 = vmatprep.subr.mxu0 0.0
        %299 = vmatpush1.msra.mxu0 %v188
        %300 = vmatprep.subr.mxu0 0.0
        %301 = vmatpush1.msra.mxu0 %v189
        %302 = vmatprep.subr.mxu0 0.0
        %303 = vmatpush1.msra.mxu0 %v190
        %304 = vmatprep.subr.mxu0 0.0
        %305 = vmatpush1.msra.mxu0 %v191
        %306 = vmatprep.subr.mxu0 0.0
        %307 = vmatpush1.msra.mxu0 %v192
        %308 = vmatprep.subr.mxu0 0.0
        %309 = vmatpush1.msra.mxu0 %v193
        %310 = vmatprep.subr.mxu0 0.0
        %311 = vmatpush1.msra.mxu0 %v194
        %312 = vmatprep.subr.mxu0 0.0
        %313 = vmatpush1.msra.mxu0 %v195
        %314 = vmatprep.subr.mxu0 0.0
        %315 = vmatpush1.msra.mxu0 0.0
        %316 = vmatprep.subr.mxu0 0.0
        %317 = vmatpush1.msra.mxu0 0.0
        %318 = vmatprep.subr.mxu0 0.0
        %319 = vmatpush1.msra.mxu0 0.0
        %320 = vmatprep.subr.mxu0 0.0
        %321 = vmatpush1.msra.mxu0 0.0
        %322 = vmatprep.subr.mxu0 0.0
        %323 = vmatpush1.msra.mxu0 0.0
        %324 = vmatprep.subr.mxu0 0.0
        %325 = vmatpush1.msra.mxu0 0.0
        %326 = vmatprep.subr.mxu0 0.0
        %327 = vmatpush1.msra.mxu0 0.0
        %328 = vmatprep.subr.mxu0 0.0
        %329 = vmatpush1.msra.mxu0 0.0
        %330 = vmatprep.subr.mxu0 0.0
        %331 = vmatpush1.msra.mxu0 0.0
        %332 = vmatprep.subr.mxu0 0.0
        %333 = vmatpush1.msra.mxu0 0.0
        %334 = vmatprep.subr.mxu0 0.0
        %335 = vmatpush1.msra.mxu0 0.0
        %336 = vmatprep.subr.mxu0 0.0
        %337 = vmatpush1.msra.mxu0 0.0
        %338 = vmatprep.subr.mxu0 0.0
        %339 = vmatpush1.msra.mxu0 0.0
        %340 = vmatprep.subr.mxu0 0.0
        %341 = vmatpush1.msra.mxu0 0.0
        %342 = vmatprep.subr.mxu0 0.0
        %343 = vmatpush1.msra.mxu0 0.0
        %344 = vmatprep.subr.mxu0 0.0
        %345 = vmatpush1.msra.mxu0 0.0
        %346 = vmatprep.subr.mxu0 0.0
        %347 = vmatpush1.msra.mxu0 0.0
        %348 = vmatprep.subr.mxu0 0.0
        %349 = vmatpush1.msra.mxu0 0.0
        %350 = vmatprep.subr.mxu0 0.0
        %351 = vmatpush1.msra.mxu0 0.0
        %352 = vmatprep.subr.mxu0 0.0
        %353 = vmatpush1.msra.mxu0 0.0
        %354 = vmatprep.subr.mxu0 0.0
        %355 = vmatpush1.msra.mxu0 0.0
        %356 = vmatprep.subr.mxu0 0.0
        %357 = vmatpush1.msra.mxu0 0.0
        %358 = vmatprep.subr.mxu0 0.0
        %359 = vmatpush1.msra.mxu0 0.0
        %360 = vmatprep.mubr.f32.mxu0 0.0
        %361 = vmatmul.mubr.f32.gmra.mrb[0].mxu0 %v291
        %v362 = vpop.f32.mrb[0].mxu0
        %v363 = vadd.f32 %v282, %v362
        %v364 = vpop.f32.mrb[0].mxu0
        %365 = vmatprep.mubr.f32.mxu0 0.0
        %366 = vmatmul.mubr.f32.gmra.mrb[0].mxu0 %v294
        %v367 = vpop.f32.mrb[0].mxu0
        %v368 = vadd.f32 %v287, %v367
        %v369 = vpop.f32.mrb[0].mxu0
        %370 = vdwg.mxu0
        %v371 = vld [vmem:[%s184 + $0x2] sm:$0xff]
        %v372 = vld [vmem:[%s184 + $0xa] sm:$0xff]
        %s373 = scalar_lea.vmem [#allocation2], 144
        %v374 = vld [vmem:[%s373] sm:$0xff]
        %v375 = vld [vmem:[%s373 + $0x8] sm:$0xff]
        %v376 = vld [vmem:[%s373 + $0x10] sm:$0xff]
        %v377 = vld [vmem:[%s373 + $0x18] sm:$0xff]
        %v378 = vld [vmem:[%s373 + $0x20] sm:$0xff]
        %v379 = vld [vmem:[%s373 + $0x28] sm:$0xff]
        %v380 = vld [vmem:[%s373 + $0x30] sm:$0xff]
        %v381 = vld [vmem:[%s373 + $0x38] sm:$0xff]
        %v382 = vld [vmem:[%s373 + $0x40] sm:$0xff]
        %v384 = vsel %vm208, %v371, 0
        %v387 = vsel %vm208, %v372, 0
        %389 = vmatprep.subr.mxu0 0.0
        %390 = vmatpush1.msra.mxu0 %v374
        %391 = vmatprep.subr.mxu0 0.0
        %392 = vmatpush1.msra.mxu0 %v375
        %393 = vmatprep.subr.mxu0 0.0
        %394 = vmatpush1.msra.mxu0 %v376
        %395 = vmatprep.subr.mxu0 0.0
        %396 = vmatpush1.msra.mxu0 %v377
        %397 = vmatprep.subr.mxu0 0.0
        %398 = vmatpush1.msra.mxu0 %v378
        %399 = vmatprep.subr.mxu0 0.0
        %400 = vmatpush1.msra.mxu0 %v379
        %401 = vmatprep.subr.mxu0 0.0
        %402 = vmatpush1.msra.mxu0 %v380
        %403 = vmatprep.subr.mxu0 0.0
        %404 = vmatpush1.msra.mxu0 %v381
        %405 = vmatprep.subr.mxu0 0.0
        %406 = vmatpush1.msra.mxu0 %v382
        %407 = vmatprep.subr.mxu0 0.0
        %408 = vmatpush1.msra.mxu0 0.0
        %409 = vmatprep.subr.mxu0 0.0
        %410 = vmatpush1.msra.mxu0 0.0
        %411 = vmatprep.subr.mxu0 0.0
        %412 = vmatpush1.msra.mxu0 0.0
        %413 = vmatprep.subr.mxu0 0.0
        %414 = vmatpush1.msra.mxu0 0.0
        %415 = vmatprep.subr.mxu0 0.0
        %416 = vmatpush1.msra.mxu0 0.0
        %417 = vmatprep.subr.mxu0 0.0
        %418 = vmatpush1.msra.mxu0 0.0
        %419 = vmatprep.subr.mxu0 0.0
        %420 = vmatpush1.msra.mxu0 0.0
        %421 = vmatprep.subr.mxu0 0.0
        %422 = vmatpush1.msra.mxu0 0.0
        %423 = vmatprep.subr.mxu0 0.0
        %424 = vmatpush1.msra.mxu0 0.0
        %425 = vmatprep.subr.mxu0 0.0
        %426 = vmatpush1.msra.mxu0 0.0
        %427 = vmatprep.subr.mxu0 0.0
        %428 = vmatpush1.msra.mxu0 0.0
        %429 = vmatprep.subr.mxu0 0.0
        %430 = vmatpush1.msra.mxu0 0.0
        %431 = vmatprep.subr.mxu0 0.0
        %432 = vmatpush1.msra.mxu0 0.0
        %433 = vmatprep.subr.mxu0 0.0
        %434 = vmatpush1.msra.mxu0 0.0
        %435 = vmatprep.subr.mxu0 0.0
        %436 = vmatpush1.msra.mxu0 0.0
        %437 = vmatprep.subr.mxu0 0.0
        %438 = vmatpush1.msra.mxu0 0.0
        %439 = vmatprep.subr.mxu0 0.0
        %440 = vmatpush1.msra.mxu0 0.0
        %441 = vmatprep.subr.mxu0 0.0
        %442 = vmatpush1.msra.mxu0 0.0
        %443 = vmatprep.subr.mxu0 0.0
        %444 = vmatpush1.msra.mxu0 0.0
        %445 = vmatprep.subr.mxu0 0.0
        %446 = vmatpush1.msra.mxu0 0.0
        %447 = vmatprep.subr.mxu0 0.0
        %448 = vmatpush1.msra.mxu0 0.0
        %449 = vmatprep.subr.mxu0 0.0
        %450 = vmatpush1.msra.mxu0 0.0
        %451 = vmatprep.subr.mxu0 0.0
        %452 = vmatpush1.msra.mxu0 0.0
        %453 = vmatprep.mubr.f32.mxu0 0.0
        %454 = vmatmul.mubr.f32.gmra.mrb[0].mxu0 %v384
        %v455 = vpop.f32.mrb[0].mxu0
        %v456 = vadd.f32 0.0, %v455
        %v457 = vpop.f32.mrb[0].mxu0
        %458 = vmatprep.mubr.f32.mxu0 0.0
        %459 = vmatmul.mubr.f32.gmra.mrb[0].mxu0 %v387
        %v460 = vpop.f32.mrb[0].mxu0
        %v461 = vadd.f32 0.0, %v460
        %v462 = vpop.f32.mrb[0].mxu0
        %463 = vdwg.mxu0
        %v464 = vadd.f32 %v363, %v456
        %v465 = vadd.f32 %v368, %v461
        %466 = vst [vmem:[%s175] sm:$0xff] %v464
        %467 = vst [vmem:[%s175 + $0x8] sm:$0xff] %v465
        %s468 = sand.u32 %s88, 1
        %s469 = scalar_lea.sflag [#allocation4], %s468
        %s470 = sand.u32 %s88, 1
        %s471 = smul.addr %s470, 16
        %s472 = scalar_lea.vmem [#allocation5], %s471
        // Predicated region
        $region33: #{tpu_custom_call.1} parent=27 // pred_check
          %p473 = pneg %p98
        $region34: #{tpu_custom_call.1} parent=27 // pred_check_branch
          %475 = sbr.rel (%p473) target = $region36
        $region35: #{tpu_custom_call.1} parent=27 // pred_region
          %s477 = ssub.s32 256, 256
          %478 = vsyncadd %s469, %s477
          %s479 = smul.addr %s22, 2
          %s480 = smul.addr %s21, 2
          %s481 = sadd.s32 %s479, %s480
          %s482 = smul.addr %s481, 128
          %s483 = scalar_lea.hbm %s2, %s482
          %s484 = sshll.u32 %s472, 4
          %s485 = int_to_ptr.vmem [resolvable:$true] %s484
          %490 = dma.vmem_to_hbm [thread:$0]  %s485, 256, %s483, %s469, 128, 128, 8
        $region36: #{tpu_custom_call.1} parent=27 // pred_fallthru
          _
      $region28: #{tpu_custom_call.1} parent=5 // pred_fallthru
        _
      %p491 = scmp.le.s32.totalorder 2, %s12
      // Predicated region
      $region37: #{tpu_custom_call.1} parent=5 // pred_check
        %p492 = pneg %p491
      $region38: #{tpu_custom_call.1} parent=5 // pred_check_branch
        %494 = sbr.rel (%p492) target = $region40
      $region39: #{tpu_custom_call.1} parent=5 // pred_region
        %s495 = ssub.s32 %s12, 2
        // Predicated region
        $region41: #{tpu_custom_call.1} parent=39 // pred_check
          %p496 = pneg %p104
        $region42: #{tpu_custom_call.1} parent=39 // pred_check_branch
          %498 = sbr.rel (%p496) target = $region44
        $region43: #{tpu_custom_call.1} parent=39 // pred_region
          %s499 = sand.u32 %s89, 1
          %s500 = scalar_lea.sflag [#allocation4], %s499
          %s501 = sand.u32 %s89, 1
          %s502 = smul.addr %s501, 16
          %s503 = scalar_lea.vmem [#allocation5], %s502
          %504 = dma.done %s500, 256
        $region44: #{tpu_custom_call.1} parent=39 // pred_fallthru
          _
      $region40: #{tpu_custom_call.1} parent=5 // pred_fallthru
        _
    $region6: #{tpu_custom_call.1} parent=1 // loop_footer
      %s16 = sadd.s32 1, %s12
    $region7: #{tpu_custom_call.1} parent=1 // loop_footer_branch
      %11 = sbr.rel target = $region3
    $region8: #{tpu_custom_call.1} parent=1 // loop_exit
      _
    %505 = vsyncpa [#allocation3], 1
    %s506 = scalar_lea.sflag [#allocation3], 1
    %507 = vsyncpa %s506, 1
    %508 = vsyncpa [#allocation4], 1
    %s509 = scalar_lea.sflag [#allocation4], 1
    %510 = vsyncpa %s509, 1

</llo_original>
